<compile_context>
chip_gen: v5e
topology: v5e:2x2
jax: 0.10.0
libtpu: 0.0.40
codegen_flags: <defaults>
</compile_context>

<pallas_src>
import functools
import math

import jax
import jax.numpy as jnp
from jax import lax
from jax.experimental import pallas as pl
from jax.experimental.pallas import tpu as pltpu

_LANE = 128
_SUBLANE = 8
_MAX_TILE_BYTES = 2 * 1024 * 1024      # per input, per pipeline buffer
_MIN_PIPELINE_STEPS = 4                # want >= this many grid steps for overlap
_PALLAS_MIN_ELEMENTS = 64 * 1024       # below this a fused XLA reduce is faster


def _cdiv(a, b):
    return -(-a // b)


def _round_up(x, m):
    return _cdiv(x, m) * m


def _rmse_partial_kernel(pred_ref, targ_ref, out_ref, *, tile_r, pack,
                         steps_per_split, total_rows, mask_from, total_blocks):
    """Accumulate per-split partial sums of (targets - predictions)**2.

    pred_ref/targ_ref: (1, tile_r, 128) blocks of the last batch row.
    out_ref:           (1, 8, 128) f32 partial-sum block for this split,
                       resident across the inner "arbitrary" grid axis.
    """
    s = pl.program_id(0)            # split ("parallel" axis; one per TensorCore)
    i = pl.program_id(1)            # block within the split ("arbitrary" axis)
    g = s * steps_per_split + i     # un-clamped global block index

    @pl.when(i == 0)
    def _():
        out_ref[...] = jnp.zeros_like(out_ref)

    n_chunks = tile_r // pack       # static Python int

    def accumulate(row_limit):
        """Fold this block's diff^2 into out_ref; rows >= row_limit are masked."""

        def body(j, part):
            off = pl.multiple_of(j * pack, pack)
            p = pred_ref[0, pl.ds(off, pack), :].astype(jnp.float32)
            t = targ_ref[0, pl.ds(off, pack), :].astype(jnp.float32)
            d = t - p
            sq = d * d
            if row_limit is not None:
                rid = off + lax.broadcasted_iota(jnp.int32, (pack, _LANE), 0)
                sq = jnp.where(rid < row_limit, sq, 0.0)
            if pack > _SUBLANE:
                sq = jnp.sum(sq.reshape(pack // _SUBLANE, _SUBLANE, _LANE), axis=0)
            return part + sq

        part = lax.fori_loop(0, n_chunks, body,
                             jnp.zeros((_SUBLANE, _LANE), jnp.float32),
                             unroll=min(n_chunks, 8))
        out_ref[0] = out_ref[0] + part

    if mask_from >= total_blocks:
        # No ragged tail and no overhang block: pure VPU steady state everywhere.
        accumulate(None)
    else:
        @pl.when(g < mask_from)
        def _():
            accumulate(None)

        @pl.when(g >= mask_from)
        def _():
            # Ragged tail block, or the (clamped) overhang block of an uneven
            # split; row_limit may be <= 0 which masks the whole block to zero.
            accumulate(total_rows - g * tile_r)


def _rmse_last_row_xla(p2, t2, n_div):
    d = t2[-1].astype(jnp.float32) - p2[-1].astype(jnp.float32)
    return jnp.sqrt(jnp.sum(d * d) * (1.0 / n_div))


def rmse_loss(predictions, targets, *, force_pallas=False, max_tile_rows=None,
              min_steps=_MIN_PIPELINE_STEPS, num_splits=None):
    """Pallas implementation of rmseLoss.forward (last-row RMSE, like the torch loop)."""
    p = jnp.squeeze(predictions)                  # torch.squeeze
    t = targets
    if t.shape != p.shape:
        t = jnp.squeeze(t)
    if p.ndim < 2:
        # torch would also fail here (predictions.shape[1]); be explicit instead.
        raise ValueError(
            f"rmse_loss: predictions must be at least 2-D after squeeze, got {p.shape}")
    if t.shape != p.shape:
        raise ValueError(
            f"rmse_loss: targets shape {targets.shape} is not compatible with "
            f"squeeze(predictions) shape {p.shape}")

    n_div = p.shape[1]                            # torch divides by shape[1]
    batch = p.shape[0]
    length = math.prod(p.shape[1:])
    # Free (metadata-only) reshapes: no HBM copy is made here.
    p2 = p.reshape(batch, length)
    t2 = t.reshape(batch, length)

    use_pallas = (length % _LANE == 0) and (force_pallas or length >= _PALLAS_MIN_ELEMENTS)
    if not use_pallas:
        # Small rows: pallas_call fixed overhead dominates; a fused XLA reduce wins.
        # TODO(synk): rows whose length is not a multiple of 128 also take this path.
        return _rmse_last_row_xla(p2, t2, n_div)

    r = length // _LANE                           # last row laid out lane-dense (r, 128)
    p3 = p2.reshape(batch, r, _LANE)              # free metadata reshape
    t3 = t2.reshape(batch, r, _LANE)

    # Sublane packing of the narrower input dtype (f32 -> 8, bf16 -> 16, int8 -> 32).
    min_item = min(jnp.dtype(p3.dtype).itemsize, jnp.dtype(t3.dtype).itemsize)
    max_item = max(jnp.dtype(p3.dtype).itemsize, jnp.dtype(t3.dtype).itemsize)
    pack = _SUBLANE * max(1, 4 // min_item)

    if max_tile_rows is None:
        max_tile_rows = _MAX_TILE_BYTES // (_LANE * max_item)
    max_tile_rows = max(pack, (max_tile_rows // pack) * pack)

    # Balanced tile: big enough to amortize the ~0.35us per-step overhead, small
    # enough that the auto-pipeline gets >= min_steps steps and the overhang past
    # `r` is bounded (masked in-kernel, never padded in HBM).
    want_steps = min(_cdiv(r, pack), max(_cdiv(r, max_tile_rows), min_steps))
    want_steps = max(want_steps, 1)
    tile_r = _round_up(_cdiv(r, want_steps), pack)
    num_steps = _cdiv(r, tile_r)

    if num_splits is None:
        # Two partial sums let megacore chips (v7x, v4/v5p) stream half the row on
        # each TensorCore; on 1-TC chips (v5e/v6e) the extra split costs ~nothing.
        num_splits = 2 if num_steps >= 8 else 1
    num_splits = max(1, int(num_splits))
    steps_per_split = _cdiv(num_steps, num_splits)
    total_blocks = num_splits * steps_per_split
    # Blocks with global index >= mask_from contain rows past the end of the row.
    mask_from = num_steps - 1 if (r % tile_r) != 0 else num_steps

    row_idx = batch - 1                           # only the last batch row is used

    def in_index_map(s, i):
        # Clamp so the (at most one) overhang block re-reads the last in-range
        # block instead of indexing out of bounds; the kernel masks it to zero.
        return (row_idx, jnp.minimum(s * steps_per_split + i, num_steps - 1), 0)

    kernel = functools.partial(
        _rmse_partial_kernel, tile_r=tile_r, pack=pack,
        steps_per_split=steps_per_split, total_rows=r,
        mask_from=mask_from, total_blocks=total_blocks)

    partials = pl.pallas_call(
        kernel,
        out_shape=jax.ShapeDtypeStruct((num_splits, _SUBLANE, _LANE), jnp.float32),
        grid_spec=pltpu.PrefetchScalarGridSpec(
            num_scalar_prefetch=0,
            grid=(num_splits, steps_per_split),
            in_specs=[
                pl.BlockSpec((1, tile_r, _LANE), in_index_map),
                pl.BlockSpec((1, tile_r, _LANE), in_index_map),
            ],
            out_specs=pl.BlockSpec((1, _SUBLANE, _LANE), lambda s, i: (s, 0, 0)),
        ),
        compiler_params=pltpu.CompilerParams(
            dimension_semantics=("parallel", "arbitrary")),
    )(p3, t3)

    # Tiny epilogue: fold the (num_splits, 8, 128) partial sums, scale, sqrt.
    return jnp.sqrt(jnp.sum(partials) * (1.0 / n_div))


if __name__ == "__main__":
    key = jax.random.PRNGKey(0)
    k1, k2, k3, k4, k5, k6 = jax.random.split(key, 6)

    def torch_ref(predictions, targets):
        p = jnp.squeeze(predictions)
        n_div = p.shape[1]
        d = targets[-1].astype(jnp.float32) - p[-1].astype(jnp.float32)
        return jnp.sqrt(jnp.sum(d * d) / n_div)

    # 1) Small / ragged row -> XLA fast path (predictions keeps a singleton dim to
    #    exercise the torch-style squeeze).
    preds_a = jax.random.normal(k1, (2, 1, 96), dtype=jnp.float32)
    targs_a = jax.random.normal(k2, (2, 96), dtype=jnp.float32)
    out_a = jax.block_until_ready(rmse_loss(preds_a, targs_a))
    assert jnp.allclose(out_a, torch_ref(preds_a, targs_a), rtol=1e-5, atol=1e-5)

    # 2) Lane-aligned row through the Pallas kernel (exercises the masked ragged
    #    sublane tail: r = 13 rows of 128 lanes, tile_r = 8).
    preds_b = jax.random.normal(k3, (2, 1, 1664), dtype=jnp.float32)
    targs_b = jax.random.normal(k4, (2, 1664), dtype=jnp.float32)
    out_b = jax.block_until_ready(rmse_loss(preds_b, targs_b, force_pallas=True))
    assert jnp.allclose(out_b, torch_ref(preds_b, targs_b), rtol=1e-5, atol=1e-5)

    # 3) Force the 2-way split (megacore path) with tiny tiles so the clamped
    #    overhang block and both masked/unmasked branches are exercised.
    preds_c = jax.random.normal(k5, (2, 1, 2560), dtype=jnp.float32)
    targs_c = jax.random.normal(k6, (2, 2560), dtype=jnp.float32)
    out_c = jax.block_until_ready(
        rmse_loss(preds_c, targs_c, force_pallas=True, max_tile_rows=8, num_splits=2))
    assert jnp.allclose(out_c, torch_ref(preds_c, targs_c), rtol=1e-5, atol=1e-5)

    print("KERNEL_OK")
</pallas_src>

<mosaic_0001>
module attributes {stable_mosaic.version = 11 : i64} {
  func.func @_rmse_partial_kernel(%arg0: i32, %arg1: i32, %arg2: memref<1x8x128xf32, #tpu.memory_space<vmem>>, %arg3: memref<1x8x128xf32, #tpu.memory_space<vmem>>, %arg4: memref<1x8x128xf32, #tpu.memory_space<vmem>>) attributes {dimension_semantics = [#tpu.dimension_semantics<parallel>, #tpu.dimension_semantics<arbitrary>], iteration_bounds = array<i64: 1, 2>, scalar_prefetch = 0 : i64, scratch_operands = 0 : i64, tpu.core_type = #tpu.core_type<tc>, window_params = [{transform_indices = @transform_0, window_bounds = array<i64: 1, 8, 128>}, {transform_indices = @transform_1, window_bounds = array<i64: 1, 8, 128>}, {transform_indices = @transform_2, window_bounds = array<i64: 1, 8, 128>}]} {
    %c2_i32 = arith.constant 2 : i32
    %0 = arith.muli %arg0, %c2_i32 : i32
    %1 = arith.addi %0, %arg1 : i32
    %c0_i32 = arith.constant 0 : i32
    %2 = arith.cmpi eq, %arg1, %c0_i32 : i32
    %3 = arith.extui %2 : i1 to i32
    %c0_i32_0 = arith.constant 0 : i32
    %4 = arith.cmpi ne, %3, %c0_i32_0 : i32
    scf.if %4 {
      %cst = arith.constant 0.000000e+00 : f32
      %11 = vector.broadcast %cst : f32 to vector<1x8x128xf32>
      %c0 = arith.constant 0 : index
      %c0_4 = arith.constant 0 : index
      %c0_5 = arith.constant 0 : index
      %12 = vector.load %arg4[%c0, %c0_4, %c0_5] : memref<1x8x128xf32, #tpu.memory_space<vmem>>, vector<1x8x128xf32>
      tpu.vector_store %arg4[%c0, %c0_4, %c0_5], %11 {strides = array<i32>} : memref<1x8x128xf32, #tpu.memory_space<vmem>>, vector<1x8x128xf32>,
    } else {
    }
    %c1_i32 = arith.constant 1 : i32
    %5 = arith.cmpi slt, %1, %c1_i32 : i32
    %6 = arith.extui %5 : i1 to i32
    %c0_i32_1 = arith.constant 0 : i32
    %7 = arith.cmpi ne, %6, %c0_i32_1 : i32
    scf.if %7 {
      %cst = arith.constant 0.000000e+00 : f32
      %11 = vector.broadcast %cst : f32 to vector<8x128xf32>
      %c0_i32_4 = arith.constant 0 : i32
      %c8_i32 = arith.constant 8 : i32
      %12 = arith.muli %c0_i32_4, %c8_i32 : i32
      %13 = tpu.assume_multiple %12, 8 : i32
      %c0 = arith.constant 0 : index
      %14 = arith.index_cast %13 : i32 to index
      %c0_5 = arith.constant 0 : index
      %15 = vector.load %arg2[%c0, %14, %c0_5] : memref<1x8x128xf32, #tpu.memory_space<vmem>>, vector<1x8x128xf32>
      %16 = vector.shape_cast %15 : vector<1x8x128xf32> to vector<8x128xf32>
      %c0_6 = arith.constant 0 : index
      %17 = arith.index_cast %13 : i32 to index
      %c0_7 = arith.constant 0 : index
      %18 = vector.load %arg3[%c0_6, %17, %c0_7] : memref<1x8x128xf32, #tpu.memory_space<vmem>>, vector<1x8x128xf32>
      %19 = vector.shape_cast %18 : vector<1x8x128xf32> to vector<8x128xf32>
      %20 = arith.subf %19, %16 : vector<8x128xf32>
      %21 = arith.mulf %20, %20 : vector<8x128xf32>
      %22 = arith.addf %11, %21 : vector<8x128xf32>
      %c1_i32_8 = arith.constant 1 : i32
      %c0_9 = arith.constant 0 : index
      %c0_10 = arith.constant 0 : index
      %c0_11 = arith.constant 0 : index
      %23 = vector.load %arg4[%c0_9, %c0_10, %c0_11] : memref<1x8x128xf32, #tpu.memory_space<vmem>>, vector<1x8x128xf32>
      %24 = vector.shape_cast %23 : vector<1x8x128xf32> to vector<8x128xf32>
      %25 = arith.addf %24, %22 : vector<8x128xf32>
      %c0_12 = arith.constant 0 : index
      %c0_13 = arith.constant 0 : index
      %c0_14 = arith.constant 0 : index
      %26 = vector.load %arg4[%c0_12, %c0_13, %c0_14] : memref<1x8x128xf32, #tpu.memory_space<vmem>>, vector<1x8x128xf32>
      %27 = vector.shape_cast %26 : vector<1x8x128xf32> to vector<8x128xf32>
      %28 = vector.shape_cast %25 : vector<8x128xf32> to vector<1x8x128xf32>
      tpu.vector_store %arg4[%c0_12, %c0_13, %c0_14], %28 {strides = array<i32>} : memref<1x8x128xf32, #tpu.memory_space<vmem>>, vector<1x8x128xf32>,
    } else {
    }
    %c1_i32_2 = arith.constant 1 : i32
    %8 = arith.cmpi sge, %1, %c1_i32_2 : i32
    %9 = arith.extui %8 : i1 to i32
    %c0_i32_3 = arith.constant 0 : i32
    %10 = arith.cmpi ne, %9, %c0_i32_3 : i32
    scf.if %10 {
      %c8_i32 = arith.constant 8 : i32
      %11 = arith.muli %1, %c8_i32 : i32
      %c13_i32 = arith.constant 13 : i32
      %12 = arith.subi %c13_i32, %11 : i32
      %cst = arith.constant 0.000000e+00 : f32
      %13 = vector.broadcast %cst : f32 to vector<8x128xf32>
      %c0_i32_4 = arith.constant 0 : i32
      %c8_i32_5 = arith.constant 8 : i32
      %14 = arith.muli %c0_i32_4, %c8_i32_5 : i32
      %15 = tpu.assume_multiple %14, 8 : i32
      %c0 = arith.constant 0 : index
      %16 = arith.index_cast %15 : i32 to index
      %c0_6 = arith.constant 0 : index
      %17 = vector.load %arg2[%c0, %16, %c0_6] : memref<1x8x128xf32, #tpu.memory_space<vmem>>, vector<1x8x128xf32>
      %18 = vector.shape_cast %17 : vector<1x8x128xf32> to vector<8x128xf32>
      %c0_7 = arith.constant 0 : index
      %19 = arith.index_cast %15 : i32 to index
      %c0_8 = arith.constant 0 : index
      %20 = vector.load %arg3[%c0_7, %19, %c0_8] : memref<1x8x128xf32, #tpu.memory_space<vmem>>, vector<1x8x128xf32>
      %21 = vector.shape_cast %20 : vector<1x8x128xf32> to vector<8x128xf32>
      %22 = arith.subf %21, %18 : vector<8x128xf32>
      %23 = arith.mulf %22, %22 : vector<8x128xf32>
      %24 = tpu.iota {dimensions = array<i32: 0>} : vector<8x128xi32>
      %25 = vector.broadcast %15 : i32 to vector<8x128xi32>
      %26 = arith.addi %25, %24 : vector<8x128xi32>
      %27 = vector.broadcast %12 : i32 to vector<8x128xi32>
      %28 = arith.cmpi slt, %26, %27 : vector<8x128xi32>
      %cst_9 = arith.constant 0.000000e+00 : f32
      %29 = vector.broadcast %cst_9 : f32 to vector<8x128xf32>
      %30 = arith.select %28, %23, %29 : vector<8x128xi1>, vector<8x128xf32>
      %31 = arith.addf %13, %30 : vector<8x128xf32>
      %c1_i32_10 = arith.constant 1 : i32
      %c0_11 = arith.constant 0 : index
      %c0_12 = arith.constant 0 : index
      %c0_13 = arith.constant 0 : index
      %32 = vector.load %arg4[%c0_11, %c0_12, %c0_13] : memref<1x8x128xf32, #tpu.memory_space<vmem>>, vector<1x8x128xf32>
      %33 = vector.shape_cast %32 : vector<1x8x128xf32> to vector<8x128xf32>
      %34 = arith.addf %33, %31 : vector<8x128xf32>
      %c0_14 = arith.constant 0 : index
      %c0_15 = arith.constant 0 : index
      %c0_16 = arith.constant 0 : index
      %35 = vector.load %arg4[%c0_14, %c0_15, %c0_16] : memref<1x8x128xf32, #tpu.memory_space<vmem>>, vector<1x8x128xf32>
      %36 = vector.shape_cast %35 : vector<1x8x128xf32> to vector<8x128xf32>
      %37 = vector.shape_cast %34 : vector<8x128xf32> to vector<1x8x128xf32>
      tpu.vector_store %arg4[%c0_14, %c0_15, %c0_16], %37 {strides = array<i32>} : memref<1x8x128xf32, #tpu.memory_space<vmem>>, vector<1x8x128xf32>,
    } else {
    }
    return
  }
  func.func @transform_0(%arg0: i32, %arg1: i32) -> (i32, i32, i32) {
    %c2_i32 = arith.constant 2 : i32
    %0 = arith.muli %arg0, %c2_i32 : i32
    %1 = arith.addi %0, %arg1 : i32
    %c1_i32 = arith.constant 1 : i32
    %2 = arith.minsi %1, %c1_i32 : i32
    %c1_i32_0 = arith.constant 1 : i32
    %c0_i32 = arith.constant 0 : i32
    %c0_i32_1 = arith.constant 0 : i32
    return %c1_i32_0, %2, %c0_i32 : i32, i32, i32
  }
  func.func @transform_1(%arg0: i32, %arg1: i32) -> (i32, i32, i32) {
    %c2_i32 = arith.constant 2 : i32
    %0 = arith.muli %arg0, %c2_i32 : i32
    %1 = arith.addi %0, %arg1 : i32
    %c1_i32 = arith.constant 1 : i32
    %2 = arith.minsi %1, %c1_i32 : i32
    %c1_i32_0 = arith.constant 1 : i32
    %c0_i32 = arith.constant 0 : i32
    %c0_i32_1 = arith.constant 0 : i32
    return %c1_i32_0, %2, %c0_i32 : i32, i32, i32
  }
  func.func @transform_2(%arg0: i32, %arg1: i32) -> (i32, i32, i32) {
    %c0_i32 = arith.constant 0 : i32
    %c0_i32_0 = arith.constant 0 : i32
    %c0_i32_1 = arith.constant 0 : i32
    return %arg0, %c0_i32, %c0_i32_0 : i32, i32, i32
  }
}

</mosaic_0001>

<llo_original>
// kernel: tpu_custom_call.1
$region0: #{tpu_custom_call.1}
  #allocation0 [shape = 'u32[]', space=smem, size = 0x4, offset = 0x4, fixed_abs, tag = 'smem constant byte address 0x4 - core index']
  #allocation1 [shape = 'u32[72,128]{1,0:T(1,128)}', space=vmem, size = 0x9000, scoped, tag = 'internal scratch']
  %s0 = inlined_call_operand.vmem [shape: f32[2,13,128], index: 0, kind: input, shape index: {}]
  %s1 = inlined_call_operand.vmem [shape: f32[2,13,128], index: 1, kind: input, shape index: {}]
  %s2 = inlined_call_operand.hbm [shape: f32[1,8,128], index: 2, kind: output, shape index: {}]
  %s3 = sld [smem:[#allocation0]]
  $region53: #{tpu_custom_call.1} parent=0
    _
  %s5 = ssub.s32 1, %s3
  %s6 = scalar_select 0, %s5, %s3
  $region1: #{tpu_custom_call.1} parent=0
    #allocation2 [shape = 'u8[4096]{0}', space=vmem, size = 0x1000, scoped, tag = 'output window, operand 0, single buffered']
    #allocation3 [shape = 's32[2]{0}', space=sflag, size = 0x8, scoped, tag = 'scoped memory for tpu_custom_call.1']
    %7 = vsyncpa [#allocation3], 0
    loop: start=0, step=1, limit=4
    $region2: #{tpu_custom_call.1} parent=1 // loop_pre_header
      _
    $region3: #{tpu_custom_call.1} parent=1 // loop_header
      %s9 = sphi 0, %s13
      %p10 = scmp.ge.s32.totalorder %s9, 4
      %s16 = sphi 0, %s28
      %s17 = sphi 0, %s24
      %s18 = sphi 0, %s16
      %s19 = sphi 0, %s17
      %s20 = sphi 0, %s18
      %s21 = sphi 0, %s19
      %s39 = sphi 0, %s41
      %s42 = sphi 0, %s39
      %s43 = sphi 0, %s42
      %s59 = sphi 0, %s43
      %s73 = sphi 0, %s75
      %s76 = sphi 0, %s73
      %s77 = sphi 0, %s76
      %s93 = sphi 0, %s77
      %s99 = sphi 0, %s101
      %s102 = sphi 0, %s99
      %s103 = sphi 0, %s102
      %s119 = sphi 0, %s103
    $region4: #{tpu_custom_call.1} parent=1 // loop_header_branch
      %12 = sbr.rel (%p10) target = $region8
    $region5: #{tpu_custom_call.1} parent=1 // loop_body
      %s14 = ssub.s32 %s9, 1
      %s15 = ssub.s32 %s9, 2
      %s22 = sadd.s32 1, %s17
      %p23 = scmp.ge.s32.totalorder %s22, 2
      %s24 = scalar_select %p23, 0, %s22
      %s25 = sadd.s32 1, %s16
      %s26 = scalar_select %p23, %s25, %s16
      %p27 = scmp.ge.s32.totalorder %s26, 1
      %s28 = scalar_select %p27, 0, %s26
      %s29 = smul.u32 %s16, 2
      %s30 = sadd.s32 %s29, %s17
      %p31 = scmp.lt.s32.totalorder %s30, 1
      %s32 = scalar_select %p31, %s30, 1
      %s33 = smul.u32 %s28, 2
      %s34 = sadd.s32 %s33, %s24
      %p35 = scmp.lt.s32.totalorder %s34, 1
      %s36 = scalar_select %p35, %s34, 1
      %s37 = ssub.s32 %s32, %s36
      %p38 = scmp.eq.s32.totalorder %s37, 0
      %s40 = sadd.s32 %s39, 1
      %s41 = scalar_select %p38, %s39, %s40
      %p44 = pneg %p38
      %p45 = scmp.eq.s32.totalorder %s9, 1
      %p46 = por %p44, %p45
      %p47 = scmp.ne.s32.totalorder %s39, %s42
      %p48 = scmp.eq.s32.totalorder %s9, 0
      %p49 = por %p47, %p48
      %p50 = scmp.ne.s32.totalorder %s39, %s42
      %p51 = scmp.eq.s32.totalorder %s14, 1
      %p52 = por %p50, %p51
      %p53 = scmp.ne.s32.totalorder %s42, %s43
      %p54 = scmp.eq.s32.totalorder %s14, 0
      %p55 = por %p53, %p54
      %p56 = scmp.ne.s32.totalorder %s42, %s43
      %p57 = scmp.eq.s32.totalorder %s15, 1
      %p58 = por %p56, %p57
      %p60 = scmp.ne.s32.totalorder %s43, %s59
      %p61 = scmp.eq.s32.totalorder %s15, 0
      %p62 = por %p60, %p61
      %s63 = smul.u32 %s16, 2
      %s64 = sadd.s32 %s63, %s17
      %p65 = scmp.lt.s32.totalorder %s64, 1
      %s66 = scalar_select %p65, %s64, 1
      %s67 = smul.u32 %s28, 2
      %s68 = sadd.s32 %s67, %s24
      %p69 = scmp.lt.s32.totalorder %s68, 1
      %s70 = scalar_select %p69, %s68, 1
      %s71 = ssub.s32 %s66, %s70
      %p72 = scmp.eq.s32.totalorder %s71, 0
      %s74 = sadd.s32 %s73, 1
      %s75 = scalar_select %p72, %s73, %s74
      %p78 = pneg %p72
      %p79 = scmp.eq.s32.totalorder %s9, 1
      %p80 = por %p78, %p79
      %p81 = scmp.ne.s32.totalorder %s73, %s76
      %p82 = scmp.eq.s32.totalorder %s9, 0
      %p83 = por %p81, %p82
      %p84 = scmp.ne.s32.totalorder %s73, %s76
      %p85 = scmp.eq.s32.totalorder %s14, 1
      %p86 = por %p84, %p85
      %p87 = scmp.ne.s32.totalorder %s76, %s77
      %p88 = scmp.eq.s32.totalorder %s14, 0
      %p89 = por %p87, %p88
      %p90 = scmp.ne.s32.totalorder %s76, %s77
      %p91 = scmp.eq.s32.totalorder %s15, 1
      %p92 = por %p90, %p91
      %p94 = scmp.ne.s32.totalorder %s77, %s93
      %p95 = scmp.eq.s32.totalorder %s15, 0
      %p96 = por %p94, %p95
      %s97 = ssub.s32 %s16, %s28
      %p98 = scmp.eq.s32.totalorder %s97, 0
      %s100 = sadd.s32 %s99, 1
      %s101 = scalar_select %p98, %s99, %s100
      %p104 = pneg %p98
      %p105 = scmp.eq.s32.totalorder %s9, 1
      %p106 = por %p104, %p105
      %p107 = scmp.ne.s32.totalorder %s99, %s102
      %p108 = scmp.eq.s32.totalorder %s9, 0
      %p109 = por %p107, %p108
      %p110 = scmp.ne.s32.totalorder %s99, %s102
      %p111 = scmp.eq.s32.totalorder %s14, 1
      %p112 = por %p110, %p111
      %p113 = scmp.ne.s32.totalorder %s102, %s103
      %p114 = scmp.eq.s32.totalorder %s14, 0
      %p115 = por %p113, %p114
      %p116 = scmp.ne.s32.totalorder %s102, %s103
      %p117 = scmp.eq.s32.totalorder %s15, 1
      %p118 = por %p116, %p117
      %p120 = scmp.ne.s32.totalorder %s103, %s119
      %p121 = scmp.eq.s32.totalorder %s15, 0
      %p122 = por %p120, %p121
      %p123 = scmp.le.s32.totalorder 1, %s9
      %p124 = scmp.lt.s32.totalorder %s9, 3
      %p125 = pnand %p123, %p124
      %p126 = pneg %p125
      // Predicated region
      $region9: #{tpu_custom_call.1} parent=5 // pred_check
        _
      $region10: #{tpu_custom_call.1} parent=5 // pred_check_branch
        %128 = sbr.rel (%p125) target = $region12
      $region11: #{tpu_custom_call.1} parent=5 // pred_region
        %s129 = ssub.s32 %s9, 1
      $region12: #{tpu_custom_call.1} parent=5 // pred_fallthru
        _
      %p130 = scmp.lt.s32.totalorder %s9, 2
      // Predicated region
      $region13: #{tpu_custom_call.1} parent=5 // pred_check
        %p131 = pneg %p130
      $region14: #{tpu_custom_call.1} parent=5 // pred_check_branch
        %133 = sbr.rel (%p131) target = $region16
      $region15: #{tpu_custom_call.1} parent=5 // pred_region
        // Predicated region
        $region17: #{tpu_custom_call.1} parent=15 // pred_check
          %p134 = pneg %p49
        $region18: #{tpu_custom_call.1} parent=15 // pred_check_branch
          %136 = sbr.rel (%p134) target = $region20
        $region19: #{tpu_custom_call.1} parent=15 // pred_region
          %s137 = smul.u32 %s16, 2
          %s138 = sadd.s32 %s137, %s17
          %p139 = scmp.lt.s32.totalorder %s138, 1
          %s140 = scalar_select %p139, %s138, 1
          %p141 = scmp.lt.s32.totalorder %s140, 1
          %s142 = scalar_select %p141, %s140, 1
          %s143 = sadd.s32 %s142, 2
          %s144 = smul.addr %s143, 8
          %s145 = scalar_lea.vmem %s0, %s144
          %s146 = smul.u32 %s16, 2
          %s147 = sadd.s32 %s146, %s17
          %p148 = scmp.lt.s32.totalorder %s147, 1
          %s149 = scalar_select %p148, %s147, 1
        $region20: #{tpu_custom_call.1} parent=15 // pred_fallthru
          _
        // Predicated region
        $region21: #{tpu_custom_call.1} parent=15 // pred_check
          %p150 = pneg %p83
        $region22: #{tpu_custom_call.1} parent=15 // pred_check_branch
          %152 = sbr.rel (%p150) target = $region24
        $region23: #{tpu_custom_call.1} parent=15 // pred_region
          %s153 = smul.u32 %s16, 2
          %s154 = sadd.s32 %s153, %s17
          %p155 = scmp.lt.s32.totalorder %s154, 1
          %s156 = scalar_select %p155, %s154, 1
          %p157 = scmp.lt.s32.totalorder %s156, 1
          %s158 = scalar_select %p157, %s156, 1
          %s159 = sadd.s32 %s158, 2
          %s160 = smul.addr %s159, 8
          %s161 = scalar_lea.vmem %s1, %s160
          %s162 = smul.u32 %s16, 2
          %s163 = sadd.s32 %s162, %s17
          %p164 = scmp.lt.s32.totalorder %s163, 1
          %s165 = scalar_select %p164, %s163, 1
        $region24: #{tpu_custom_call.1} parent=15 // pred_fallthru
          _
      $region16: #{tpu_custom_call.1} parent=5 // pred_fallthru
        _
      %p166 = scmp.le.s32.totalorder 1, %s9
      %p167 = scmp.lt.s32.totalorder %s9, 3
      %p168 = pnand %p166, %p167
      %p169 = pneg %p168
      // Predicated region
      $region25: #{tpu_custom_call.1} parent=5 // pred_check
        _
      $region26: #{tpu_custom_call.1} parent=5 // pred_check_branch
        %171 = sbr.rel (%p168) target = $region28
      $region27: #{tpu_custom_call.1} parent=5 // pred_region
        %s172 = ssub.s32 %s9, 1
        %s173 = smul.u32 %s18, 2
        %s174 = sadd.s32 %s173, %s19
        %p175 = scmp.lt.s32.totalorder %s174, 1
        %s176 = scalar_select %p175, %s174, 1
        %p177 = scmp.lt.s32.totalorder %s176, 1
        %s178 = scalar_select %p177, %s176, 1
        %s179 = sadd.s32 %s178, 2
        %s180 = smul.addr %s179, 8
        %s181 = scalar_lea.vmem %s0, %s180
        %p182 = pneg %p55
        %p183 = pneg %p52
        %s184 = smul.u32 %s18, 2
        %s185 = sadd.s32 %s184, %s19
        %p186 = scmp.lt.s32.totalorder %s185, 1
        %s187 = scalar_select %p186, %s185, 1
        %p188 = scmp.lt.s32.totalorder %s187, 1
        %s189 = scalar_select %p188, %s187, 1
        %s190 = sadd.s32 %s189, 2
        %s191 = smul.addr %s190, 8
        %s192 = scalar_lea.vmem %s1, %s191
        %p193 = pneg %p89
        %p194 = pneg %p86
        %p195 = pneg %p115
        %p196 = pneg %p112
        %s197 = smul.u32 %s18, 2
        %s198 = sadd.s32 %s197, %s19
        %p199 = scmp.lt.s32.totalorder %s198, 1
        %s200 = scalar_select %p199, %s198, 1
        %p201 = scmp.lt.s32.totalorder %s200, 1
        %s202 = scalar_select %p201, %s200, 1
        %s203 = sadd.s32 %s202, 2
        %s204 = smul.addr %s203, 8
        %s205 = scalar_lea.vmem %s0, %s204
        %s206 = smul.u32 %s18, 2
        %s207 = sadd.s32 %s206, %s19
        %p208 = scmp.lt.s32.totalorder %s207, 1
        %s209 = scalar_select %p208, %s207, 1
        %s210 = smul.u32 %s18, 2
        %s211 = sadd.s32 %s210, %s19
        %p212 = scmp.lt.s32.totalorder %s211, 1
        %s213 = scalar_select %p212, %s211, 1
        %p214 = scmp.lt.s32.totalorder %s213, 1
        %s215 = scalar_select %p214, %s213, 1
        %s216 = sadd.s32 %s215, 2
        %s217 = smul.addr %s216, 8
        %s218 = scalar_lea.vmem %s1, %s217
        %s219 = smul.u32 %s18, 2
        %s220 = sadd.s32 %s219, %s19
        %p221 = scmp.lt.s32.totalorder %s220, 1
        %s222 = scalar_select %p221, %s220, 1
        %s223 = smul.u32 %s18, 2
        %s224 = sadd.s32 %s223, %s19
        %p225 = scmp.eq.s32.totalorder %s19, 0
        // Predicated region
        $region29: #{tpu_custom_call.1} parent=27 // pred_check
          %p226 = pneg %p225
        $region30: #{tpu_custom_call.1} parent=27 // pred_check_branch
          %228 = sbr.rel (%p226) target = $region32
        $region31: #{tpu_custom_call.1} parent=27 // pred_region
          %229 = vst [vmem:[#allocation2] sm:$0xff] 0.0
        $region32: #{tpu_custom_call.1} parent=27 // pred_fallthru
          _
        %p230 = scmp.lt.s32.totalorder %s224, 1
        // Predicated region
        $region33: #{tpu_custom_call.1} parent=27 // pred_check
          %p231 = pneg %p230
        $region34: #{tpu_custom_call.1} parent=27 // pred_check_branch
          %233 = sbr.rel (%p231) target = $region36
        $region35: #{tpu_custom_call.1} parent=27 // pred_region
          %v234 = vld [vmem:[%s205] sm:$0xff]
          %v235 = vld [vmem:[%s218] sm:$0xff]
          %v236 = vsub.f32 %v235, %v234
          %v237 = vmul.f32 %v236, %v236
          %v238 = vadd.f32 %v237, 0.0
          %v239 = vld [vmem:[#allocation2] sm:$0xff]
          %v240 = vadd.f32 %v239, %v238
          %241 = vst [vmem:[#allocation2] sm:$0xff] %v240
        $region36: #{tpu_custom_call.1} parent=27 // pred_fallthru
          _
        %p242 = scmp.ge.s32.totalorder %s224, 1
        // Predicated region
        $region37: #{tpu_custom_call.1} parent=27 // pred_check
          %p243 = pneg %p242
        $region38: #{tpu_custom_call.1} parent=27 // pred_check_branch
          %245 = sbr.rel (%p243) target = $region40
        $region39: #{tpu_custom_call.1} parent=27 // pred_region
          %s246 = smul.u32 %s224, 8
          %s247 = ssub.s32 13, %s246
          %v248 = vld [vmem:[%s205] sm:$0xff]
          %v249 = vld [vmem:[%s218] sm:$0xff]
          %v250 = vsub.f32 %v249, %v248
          %v251 = vmul.f32 %v250, %v250
          %v252 = vlaneseq
          %v253 = vshrl.u32 %v252, 7
          %v254 = vstv 0
          %v255 = vadd.s32 %v254, %v253
          %v256 = vstv %s247
          %vm257 = vcmp.lt.s32.totalorder %v255, %v256
          %v258 = vsel %vm257, %v251, 0.0
          %v259 = vadd.f32 %v258, 0.0
          %v260 = vld [vmem:[#allocation2] sm:$0xff]
          %v261 = vadd.f32 %v260, %v259
          %262 = vst [vmem:[#allocation2] sm:$0xff] %v261
        $region40: #{tpu_custom_call.1} parent=27 // pred_fallthru
          _
        // Predicated region
        $region41: #{tpu_custom_call.1} parent=27 // pred_check
          %p263 = pneg %p112
        $region42: #{tpu_custom_call.1} parent=27 // pred_check_branch
          %265 = sbr.rel (%p263) target = $region44
        $region43: #{tpu_custom_call.1} parent=27 // pred_region
          %267 = vsyncadd [#allocation3], 0
          %s268 = smul.addr %s18, 8
          %s269 = scalar_lea.hbm %s2, %s268
          %s271 = sshll.u32 [#allocation2], 4
          %s272 = int_to_ptr.vmem [resolvable:$true] %s271
          %s273 = sshll.u32 %s269, 4
          %s274 = int_to_ptr.hbm [resolvable:$true] %s273
          %276 = dma.vmem_to_hbm [thread:$0]  %s272, 128, %s274, [#allocation3]
        $region44: #{tpu_custom_call.1} parent=27 // pred_fallthru
          _
        // Predicated region
        $region45: #{tpu_custom_call.1} parent=27 // pred_check
          %p277 = pneg %p112
        $region46: #{tpu_custom_call.1} parent=27 // pred_check_branch
          %279 = sbr.rel (%p277) target = $region48
        $region47: #{tpu_custom_call.1} parent=27 // pred_region
          %281 = dma.done [#allocation3], 128
        $region48: #{tpu_custom_call.1} parent=27 // pred_fallthru
          _
      $region28: #{tpu_custom_call.1} parent=5 // pred_fallthru
        _
      %p282 = scmp.le.s32.totalorder 2, %s9
      // Predicated region
      $region49: #{tpu_custom_call.1} parent=5 // pred_check
        %p283 = pneg %p282
      $region50: #{tpu_custom_call.1} parent=5 // pred_check_branch
        %285 = sbr.rel (%p283) target = $region52
      $region51: #{tpu_custom_call.1} parent=5 // pred_region
        %s286 = ssub.s32 %s9, 2
      $region52: #{tpu_custom_call.1} parent=5 // pred_fallthru
        _
    $region6: #{tpu_custom_call.1} parent=1 // loop_footer
      %s13 = sadd.s32 1, %s9
    $region7: #{tpu_custom_call.1} parent=1 // loop_footer_branch
      %8 = sbr.rel target = $region3
    $region8: #{tpu_custom_call.1} parent=1 // loop_exit
      _
    %287 = vsyncpa [#allocation3], 1
    %s288 = scalar_lea.sflag [#allocation3], 1
    %289 = vsyncpa %s288, 1

</llo_original>
